<compile_context>
chip_gen: v5e
topology: v5e:2x2
jax: 0.10.0
libtpu: 0.0.40
codegen_flags: <defaults>
</compile_context>

<pallas_src>
import jax
import jax.numpy as jnp
from jax.experimental import pallas as pl
from jax.experimental.pallas import tpu as pltpu


def decoder_kernel(x_ref, w1_ref, b1_ref, w2_ref, b2_ref, o_ref):
    # Cast activations to the MXU dtype in-register (free VPU work); weights
    # arrive already in bf16.  Accumulation stays f32; bias add / ReLU /
    # sigmoid run in f32 on the VPU/EUP (v5e has no bf16 VPU/EUP path).
    x = x_ref[...].astype(w1_ref.dtype)
    h = jnp.dot(x, w1_ref[...], preferred_element_type=jnp.float32)
    h = jnp.maximum(h + b1_ref[...], 0.0)                 # (1, H) broadcasts

    y = jnp.dot(h.astype(w2_ref.dtype), w2_ref[...],
                preferred_element_type=jnp.float32)
    y = jax.nn.sigmoid(y + b2_ref[...])                   # (1, O) broadcasts

    o_ref[...] = y.astype(o_ref.dtype)                    # direct (B_blk, O) store


def _round_up(v, m):
    return ((v + m - 1) // m) * m


def decoder_forward(x, w1, b1, w2, b2, *, block_b=512,
                    matmul_dtype=jnp.bfloat16, out_dtype=None):
    """x:(B,L), w1:(L,H), b1:(H,)|(1,H), w2:(H,O), b2:(O,)|(1,O) -> (B,O)."""
    B, L = x.shape
    H = w1.shape[1]
    O = w2.shape[1]
    out_dtype = x.dtype if out_dtype is None else out_dtype

    # --- batch tiling --------------------------------------------------------
    # 16-row alignment (bf16 sublane pack; also satisfies the f32 (8,128) rule).
    ALIGN = 16
    B_al = _round_up(B, ALIGN)
    B_blk = max(ALIGN, min(_round_up(block_b, ALIGN), B_al))
    # Prefer >= 2 grid steps when the batch permits: keeps both v7x TCs busy
    # and gives the pipeline something to overlap.
    if B_al >= 2 * ALIGN and B_al // B_blk < 2:
        B_blk = _round_up(pl.cdiv(B_al, 2), ALIGN)
    B_pad = _round_up(B_al, B_blk)
    grid = (B_pad // B_blk,)

    # Only pad when needed (padded rows produce sigmoid(b2) and are sliced off).
    xp = x if B_pad == B else jnp.pad(x, ((0, B_pad - B), (0, 0)))

    # bf16 weights (tiny one-time cast, halves their DMA/VMEM); f32 biases.
    w1c = w1.astype(matmul_dtype)
    w2c = w2.astype(matmul_dtype)
    b1c = b1.reshape(1, -1).astype(jnp.float32)
    b2c = b2.reshape(1, -1).astype(jnp.float32)

    flops = 2 * B_pad * (L * H + H * O)
    bytes_accessed = (
        xp.size * xp.dtype.itemsize
        + w1c.size * w1c.dtype.itemsize
        + w2c.size * w2c.dtype.itemsize
        + b1c.size * 4 + b2c.size * 4
        + B_pad * O * jnp.dtype(out_dtype).itemsize)

    out = pl.pallas_call(
        decoder_kernel,
        out_shape=jax.ShapeDtypeStruct((B_pad, O), out_dtype),
        grid=grid,
        in_specs=[
            pl.BlockSpec((B_blk, L), lambda i: (i, 0)),   # activations: tiled
            pl.BlockSpec((L, H),     lambda i: (0, 0)),   # W1: VMEM-resident
            pl.BlockSpec((1, H),     lambda i: (0, 0)),   # b1: VMEM-resident
            pl.BlockSpec((H, O),     lambda i: (0, 0)),   # W2: VMEM-resident
            pl.BlockSpec((1, O),     lambda i: (0, 0)),   # b2: VMEM-resident
        ],
        out_specs=pl.BlockSpec((B_blk, O), lambda i: (i, 0)),
        compiler_params=pltpu.CompilerParams(
            dimension_semantics=("parallel",)),           # megacore on v7x
        cost_estimate=pl.CostEstimate(
            flops=flops,
            transcendentals=B_pad * O,                    # sigmoid exp
            bytes_accessed=bytes_accessed),
    )(xp, w1c, b1c, w2c, b2c)

    return out if B_pad == B else out[:B]


def reference_forward(x, w1, b1, w2, b2, matmul_dtype=jnp.float32):
    """Pure-JAX reference with optional matching matmul-input dtype."""
    h = jnp.dot(x.astype(matmul_dtype), w1.astype(matmul_dtype),
                preferred_element_type=jnp.float32)
    h = jnp.maximum(h + b1.reshape(1, -1), 0.0)
    y = jnp.dot(h.astype(matmul_dtype), w2.astype(matmul_dtype),
                preferred_element_type=jnp.float32)
    return jax.nn.sigmoid(y + b2.reshape(1, -1))


if __name__ == "__main__":
    # Shapes implied by Decoder(latent_size, hidden_size, output_size)
    batch, latent, hidden, output = 8, 16, 32, 64

    key = jax.random.PRNGKey(0)
    k_x, k_w1, k_b1, k_w2, k_b2, k_big = jax.random.split(key, 6)

    x = jax.random.normal(k_x, (batch, latent), dtype=jnp.float32)

    # Deterministic param init (Kaiming-uniform-ish scale), stored as (in, out);
    # biases stored as (features,) like PyTorch nn.Linear.
    s1 = 1.0 / jnp.sqrt(latent)
    w1 = jax.random.uniform(k_w1, (latent, hidden), jnp.float32, -s1, s1)
    b1 = jax.random.uniform(k_b1, (hidden,), jnp.float32, -s1, s1)
    s2 = 1.0 / jnp.sqrt(hidden)
    w2 = jax.random.uniform(k_w2, (hidden, output), jnp.float32, -s2, s2)
    b2 = jax.random.uniform(k_b2, (output,), jnp.float32, -s2, s2)

    # --- small-batch correctness (one 16-row block) --------------------------
    out = decoder_forward(x, w1, b1, w2, b2)
    jax.block_until_ready(out)
    assert out.shape == (batch, output)

    # NOTE: bf16 matmul inputs are an intentional precision trade-off vs. the
    # pure-f32 reference (inference-grade); accumulation and epilogue are f32.
    ref_bf16 = reference_forward(x, w1, b1, w2, b2, matmul_dtype=jnp.bfloat16)
    ref_f32 = reference_forward(x, w1, b1, w2, b2, matmul_dtype=jnp.float32)
    assert jnp.allclose(out, ref_bf16, atol=1e-3, rtol=1e-3)   # same-precision
    assert jnp.allclose(out, ref_f32, atol=3e-2, rtol=3e-2)    # f32 sanity

    # --- larger batch exercises the gridded path (2 steps of 128 rows) -------
    x_big = jax.random.normal(k_big, (256, latent), dtype=jnp.float32)
    out_big = decoder_forward(x_big, w1, b1, w2, b2)
    jax.block_until_ready(out_big)
    ref_big = reference_forward(x_big, w1, b1, w2, b2, matmul_dtype=jnp.bfloat16)
    assert out_big.shape == (256, output)
    assert jnp.allclose(out_big, ref_big, atol=1e-3, rtol=1e-3)

    print("KERNEL_OK")
</pallas_src>

<mosaic_0001>
module attributes {stable_mosaic.version = 11 : i64} {
  func.func @decoder_kernel(%arg0: i32, %arg1: memref<16x16xf32, #tpu.memory_space<vmem>>, %arg2: memref<16x32xbf16, #tpu.memory_space<vmem>>, %arg3: memref<1x32xf32, #tpu.memory_space<vmem>>, %arg4: memref<32x64xbf16, #tpu.memory_space<vmem>>, %arg5: memref<1x64xf32, #tpu.memory_space<vmem>>, %arg6: memref<16x64xf32, #tpu.memory_space<vmem>>) attributes {dimension_semantics = [#tpu.dimension_semantics<parallel>], iteration_bounds = array<i64: 1>, scalar_prefetch = 0 : i64, scratch_operands = 0 : i64, tpu.core_type = #tpu.core_type<tc>, window_params = [{transform_indices = @transform_0, window_bounds = array<i64: 16, 16>}, {pipeline_mode = #tpu.pipeline_mode<synchronous>, transform_indices = @transform_1, window_bounds = array<i64: 16, 32>}, {pipeline_mode = #tpu.pipeline_mode<synchronous>, transform_indices = @transform_2, window_bounds = array<i64: 1, 32>}, {pipeline_mode = #tpu.pipeline_mode<synchronous>, transform_indices = @transform_3, window_bounds = array<i64: 32, 64>}, {pipeline_mode = #tpu.pipeline_mode<synchronous>, transform_indices = @transform_4, window_bounds = array<i64: 1, 64>}, {transform_indices = @transform_5, window_bounds = array<i64: 16, 64>}]} {
    %c0 = arith.constant 0 : index
    %c0_0 = arith.constant 0 : index
    %0 = vector.load %arg1[%c0, %c0_0] : memref<16x16xf32, #tpu.memory_space<vmem>>, vector<16x16xf32>
    %1 = arith.truncf %0 : vector<16x16xf32> to vector<16x16xbf16>
    %c0_1 = arith.constant 0 : index
    %c0_2 = arith.constant 0 : index
    %2 = vector.load %arg2[%c0_1, %c0_2] : memref<16x32xbf16, #tpu.memory_space<vmem>>, vector<16x32xbf16>
    %cst = arith.constant dense<0.000000e+00> : vector<16x32xf32>
    %3 = tpu.matmul %1, %2, %cst {dimension_numbers = #tpu.dot_dimension_numbers<[1], [0], [0], [1], [0, 0, 1, 1], [], []>} : vector<16x16xbf16>, vector<16x32xbf16>, vector<16x32xf32> -> vector<16x32xf32>
    %c0_3 = arith.constant 0 : index
    %c0_4 = arith.constant 0 : index
    %4 = vector.load %arg3[%c0_3, %c0_4] : memref<1x32xf32, #tpu.memory_space<vmem>>, vector<1x32xf32>
    %5 = vector.broadcast %4 : vector<1x32xf32> to vector<16x32xf32>
    %6 = arith.addf %3, %5 : vector<16x32xf32>
    %cst_5 = arith.constant 0.000000e+00 : f32
    %7 = vector.broadcast %cst_5 : f32 to vector<16x32xf32>
    %8 = arith.maximumf %6, %7 : vector<16x32xf32>
    %9 = arith.truncf %8 : vector<16x32xf32> to vector<16x32xbf16>
    %c0_6 = arith.constant 0 : index
    %c0_7 = arith.constant 0 : index
    %10 = vector.load %arg4[%c0_6, %c0_7] : memref<32x64xbf16, #tpu.memory_space<vmem>>, vector<32x64xbf16>
    %cst_8 = arith.constant dense<0.000000e+00> : vector<16x64xf32>
    %11 = tpu.matmul %9, %10, %cst_8 {dimension_numbers = #tpu.dot_dimension_numbers<[1], [0], [0], [1], [0, 0, 1, 1], [], []>} : vector<16x32xbf16>, vector<32x64xbf16>, vector<16x64xf32> -> vector<16x64xf32>
    %c0_9 = arith.constant 0 : index
    %c0_10 = arith.constant 0 : index
    %12 = vector.load %arg5[%c0_9, %c0_10] : memref<1x64xf32, #tpu.memory_space<vmem>>, vector<1x64xf32>
    %13 = vector.broadcast %12 : vector<1x64xf32> to vector<16x64xf32>
    %14 = arith.addf %11, %13 : vector<16x64xf32>
    %15 = arith.negf %14 : vector<16x64xf32>
    %16 = math.exp %15 : vector<16x64xf32>
    %cst_11 = arith.constant 1.000000e+00 : f32
    %17 = vector.broadcast %cst_11 : f32 to vector<16x64xf32>
    %18 = arith.addf %17, %16 : vector<16x64xf32>
    %19 = arith.divf %17, %18 : vector<16x64xf32>
    %c0_12 = arith.constant 0 : index
    %c0_13 = arith.constant 0 : index
    %20 = vector.load %arg6[%c0_12, %c0_13] : memref<16x64xf32, #tpu.memory_space<vmem>>, vector<16x64xf32>
    tpu.vector_store %arg6[%c0_12, %c0_13], %19 {strides = array<i32>} : memref<16x64xf32, #tpu.memory_space<vmem>>, vector<16x64xf32>,
    return
  }
  func.func @transform_0(%arg0: i32) -> (i32, i32) {
    %c0_i32 = arith.constant 0 : i32
    %c0_i32_0 = arith.constant 0 : i32
    return %arg0, %c0_i32 : i32, i32
  }
  func.func @transform_1(%arg0: i32) -> (i32, i32) {
    %c0_i32 = arith.constant 0 : i32
    %c0_i32_0 = arith.constant 0 : i32
    %c0_i32_1 = arith.constant 0 : i32
    return %c0_i32, %c0_i32_0 : i32, i32
  }
  func.func @transform_2(%arg0: i32) -> (i32, i32) {
    %c0_i32 = arith.constant 0 : i32
    %c0_i32_0 = arith.constant 0 : i32
    %c0_i32_1 = arith.constant 0 : i32
    return %c0_i32, %c0_i32_0 : i32, i32
  }
  func.func @transform_3(%arg0: i32) -> (i32, i32) {
    %c0_i32 = arith.constant 0 : i32
    %c0_i32_0 = arith.constant 0 : i32
    %c0_i32_1 = arith.constant 0 : i32
    return %c0_i32, %c0_i32_0 : i32, i32
  }
  func.func @transform_4(%arg0: i32) -> (i32, i32) {
    %c0_i32 = arith.constant 0 : i32
    %c0_i32_0 = arith.constant 0 : i32
    %c0_i32_1 = arith.constant 0 : i32
    return %c0_i32, %c0_i32_0 : i32, i32
  }
  func.func @transform_5(%arg0: i32) -> (i32, i32) {
    %c0_i32 = arith.constant 0 : i32
    %c0_i32_0 = arith.constant 0 : i32
    return %arg0, %c0_i32 : i32, i32
  }
}

</mosaic_0001>

<llo_original>
// kernel: tpu_custom_call.1
$region0: #{tpu_custom_call.1}
  #allocation0 [shape = 'u32[]', space=smem, size = 0x4, offset = 0x4, fixed_abs, tag = 'smem constant byte address 0x4 - core index']
  #allocation1 [shape = 'u32[72,128]{1,0:T(1,128)}', space=vmem, size = 0x9000, scoped, tag = 'internal scratch']
  %s0 = inlined_call_operand.hbm [shape: f32[16,16], index: 0, kind: input, shape index: {}]
  %s1 = inlined_call_operand.hbm [shape: bf16[16,32], index: 1, kind: input, shape index: {}]
  %s2 = inlined_call_operand.vmem [shape: f32[1,32], index: 2, kind: input, shape index: {}]
  %s3 = inlined_call_operand.hbm [shape: bf16[32,64], index: 3, kind: input, shape index: {}]
  %s4 = inlined_call_operand.vmem [shape: f32[1,64], index: 4, kind: input, shape index: {}]
  %s5 = inlined_call_operand.hbm [shape: f32[16,64], index: 5, kind: output, shape index: {}]
  %s6 = sld [smem:[#allocation0]]
  $region42: #{tpu_custom_call.1} parent=0
    _
  %s8 = ssub.s32 1, %s6
  %s9 = scalar_select 0, %s8, %s6
  $region1: #{tpu_custom_call.1} parent=0
    #allocation2 [shape = 'u8[8192]{0}', space=vmem, size = 0x2000, scoped, tag = 'input window, operand 0, single buffered']
    #allocation3 [shape = 's32[1]{0}', space=sflag, size = 0x4, scoped, tag = 'scoped memory for tpu_custom_call.1']
    #allocation4 [shape = 's32[1]{0}', space=sflag, size = 0x4, scoped, tag = 'scoped memory for tpu_custom_call.1']
    #allocation5 [shape = 'u8[4096]{0}', space=vmem, size = 0x1000, scoped, tag = 'input window, operand 1, single buffered']
    #allocation6 [shape = 's32[1]{0}', space=sflag, size = 0x4, scoped, tag = 'scoped memory for tpu_custom_call.1']
    #allocation7 [shape = 'u8[8192]{0}', space=vmem, size = 0x2000, scoped, tag = 'input window, operand 3, single buffered']
    #allocation8 [shape = 'u8[8192]{0}', space=vmem, size = 0x2000, scoped, tag = 'output window, operand 0, single buffered']
    %10 = vsyncpa [#allocation3], 0
    %11 = vsyncpa [#allocation6], 0
    %12 = vsyncpa [#allocation4], 0
    // Predicated region
    $region2: #{tpu_custom_call.1} parent=1 // pred_check
      _
    $region3: #{tpu_custom_call.1} parent=1 // pred_check_branch
      %14 = sbr.rel (0) target = $region5
    $region4: #{tpu_custom_call.1} parent=1 // pred_region
      %16 = vsyncadd [#allocation3], 0
      %s17 = sshll.u32 %s0, 4
      %s18 = int_to_ptr.hbm [resolvable:$true] %s17
      %s19 = sshll.u32 [#allocation2], 4
      %s20 = int_to_ptr.vmem [resolvable:$true] %s19
      %25 = dma.hbm_to_vmem [thread:$0]  %s18, 256, %s20, [#allocation3], 128, 128, 8
    $region5: #{tpu_custom_call.1} parent=1 // pred_fallthru
      _
    // Predicated region
    $region6: #{tpu_custom_call.1} parent=1 // pred_check
      _
    $region7: #{tpu_custom_call.1} parent=1 // pred_check_branch
      %27 = sbr.rel (0) target = $region9
    $region8: #{tpu_custom_call.1} parent=1 // pred_region
      %29 = vsyncadd [#allocation6], 0
      %s30 = sshll.u32 %s1, 4
      %s31 = int_to_ptr.hbm [resolvable:$true] %s30
      %s32 = sshll.u32 [#allocation5], 4
      %s33 = int_to_ptr.vmem [resolvable:$true] %s32
      %38 = dma.hbm_to_vmem [thread:$0]  %s31, 128, %s33, [#allocation6], 64, 64, 4
    $region9: #{tpu_custom_call.1} parent=1 // pred_fallthru
      _
    // Predicated region
    $region10: #{tpu_custom_call.1} parent=1 // pred_check
      _
    $region11: #{tpu_custom_call.1} parent=1 // pred_check_branch
      %40 = sbr.rel (0) target = $region13
    $region12: #{tpu_custom_call.1} parent=1 // pred_region
      _
    $region13: #{tpu_custom_call.1} parent=1 // pred_fallthru
      _
    // Predicated region
    $region14: #{tpu_custom_call.1} parent=1 // pred_check
      _
    $region15: #{tpu_custom_call.1} parent=1 // pred_check_branch
      %42 = sbr.rel (0) target = $region17
    $region16: #{tpu_custom_call.1} parent=1 // pred_region
      %44 = vsyncadd [#allocation6], 0
      %s45 = sshll.u32 %s3, 4
      %s46 = int_to_ptr.hbm [resolvable:$true] %s45
      %s47 = sshll.u32 [#allocation7], 4
      %s48 = int_to_ptr.vmem [resolvable:$true] %s47
      %53 = dma.hbm_to_vmem [thread:$0]  %s46, 256, %s48, [#allocation6], 64, 64, 4
    $region17: #{tpu_custom_call.1} parent=1 // pred_fallthru
      _
    // Predicated region
    $region18: #{tpu_custom_call.1} parent=1 // pred_check
      _
    $region19: #{tpu_custom_call.1} parent=1 // pred_check_branch
      %55 = sbr.rel (0) target = $region21
    $region20: #{tpu_custom_call.1} parent=1 // pred_region
      _
    $region21: #{tpu_custom_call.1} parent=1 // pred_fallthru
      _
    // Predicated region
    $region22: #{tpu_custom_call.1} parent=1 // pred_check
      _
    $region23: #{tpu_custom_call.1} parent=1 // pred_check_branch
      %57 = sbr.rel (0) target = $region25
    $region24: #{tpu_custom_call.1} parent=1 // pred_region
      %59 = dma.done [#allocation3], 256
    $region25: #{tpu_custom_call.1} parent=1 // pred_fallthru
      _
    // Predicated region
    $region26: #{tpu_custom_call.1} parent=1 // pred_check
      _
    $region27: #{tpu_custom_call.1} parent=1 // pred_check_branch
      %61 = sbr.rel (0) target = $region29
    $region28: #{tpu_custom_call.1} parent=1 // pred_region
      %63 = dma.done [#allocation6], 128
    $region29: #{tpu_custom_call.1} parent=1 // pred_fallthru
      _
    // Predicated region
    $region30: #{tpu_custom_call.1} parent=1 // pred_check
      _
    $region31: #{tpu_custom_call.1} parent=1 // pred_check_branch
      %65 = sbr.rel (0) target = $region33
    $region32: #{tpu_custom_call.1} parent=1 // pred_region
      %67 = dma.done [#allocation6], 256
    $region33: #{tpu_custom_call.1} parent=1 // pred_fallthru
      _
    %v69 = vld [vmem:[#allocation2] sm:$0xff]
    %v70 = vld [vmem:[#allocation2 + $0x8] sm:$0xff]
    %v71 = vpack.c.bf16 %v70, %v69
    %v72 = vld [vmem:[#allocation5] sm:$0xf]
    %v73 = vld [vmem:[#allocation5 + $0x4] sm:$0xf]
    %v74 = vld [vmem:[%s2] sm:$0x1]
    %v76 = vperm.slane %v74, 0
    %v80 = vunpack.c.l.b16 %v72
    %v81 = vunpack.c.l.b16 %v73
    %v82 = vpack.c.b16 %v81, %v80
    %vm84 = vcmask 130048
    %v86 = vsel %vm84, %v71, 0
    %88 = vmatpush.bf16.msra.mxu0 0
    %89 = vmatpush.bf16.msra.mxu0 0
    %90 = vmatpush.bf16.msra.mxu0 0
    %91 = vmatpush.bf16.msra.mxu0 0
    %92 = vmatpush.bf16.msra.mxu0 0
    %93 = vmatpush.bf16.msra.mxu0 0
    %94 = vmatpush.bf16.msra.mxu0 0
    %95 = vmatpush.bf16.msra.mxu0 %v82
    %96 = vmatmul.bf16.gmra.mxu0 %v86
    %v97 = vpop.f32.mrf.mxu0
    %v98 = vadd.f32 %v76, %v97
    %v99 = vpop.f32.mrf.mxu0
    %v100 = vadd.f32 %v76, %v99
    %101 = vdwg.mxu0
    %v102 = vmax.f32 %v98, 0.0
    %v103 = vmax.f32 %v100, 0.0
    %v104 = vpack.c.bf16 %v103, %v102
    %v105 = vld [vmem:[#allocation7] sm:$0xf]
    %v106 = vld [vmem:[#allocation7 + $0x4] sm:$0xf]
    %v107 = vld [vmem:[#allocation7 + $0x8] sm:$0xf]
    %v108 = vld [vmem:[#allocation7 + $0xc] sm:$0xf]
    %v109 = vld [vmem:[%s4] sm:$0x1]
    %v111 = vperm.slane %v109, 0
    %v117 = vunpack.c.l.b16 %v105
    %v118 = vunpack.c.l.b16 %v106
    %v119 = vunpack.c.l.b16 %v107
    %v120 = vunpack.c.l.b16 %v108
    %v121 = vpack.c.b16 %v118, %v117
    %v122 = vpack.c.b16 %v120, %v119
    %vm125 = vcmask 261120
    %v127 = vsel %vm125, %v104, 0
    %129 = vmatpush.bf16.msra.mxu0 0
    %130 = vmatpush.bf16.msra.mxu0 0
    %131 = vmatpush.bf16.msra.mxu0 0
    %132 = vmatpush.bf16.msra.mxu0 0
    %133 = vmatpush.bf16.msra.mxu0 0
    %134 = vmatpush.bf16.msra.mxu0 0
    %135 = vmatpush.bf16.msra.mxu0 %v122
    %136 = vmatpush.bf16.msra.mxu0 %v121
    %137 = vmatmul.bf16.gmra.mxu0 %v127
    %v138 = vpop.f32.mrf.mxu0
    %v139 = vadd.f32 %v111, %v138
    %v140 = vpop.f32.mrf.mxu0
    %v141 = vadd.f32 %v111, %v140
    %142 = vdwg.mxu0
    %v143 = vxor.u32 %v139, 2147483648
    %v144 = vxor.u32 %v141, 2147483648
    %v145 = vmul.f32 %v143, 1.442695
    %v146 = vpow.pop %v145
    %v147 = vmul.f32 %v144, 1.442695
    %v148 = vpow.pop %v147
    %v149 = vadd.f32 %v146, 1.0
    %v150 = vadd.f32 %v148, 1.0
    %v151 = vrcp.pop %v149
    %v152 = vmul.f32 %v149, %v151
    %v153 = vsub.f32 1.0, %v152
    %v154 = vmul.f32 %v151, %v153
    %v155 = vadd.f32 %v151, %v154
    %vm156 = vweird.f32 %v149
    %vm157 = vweird.f32 %v151
    %vm158 = vmor %vm156, %vm157
    %v159 = vsel %vm158, %v151, %v155
    %v160 = vand.u32 2147483647, %v149
    %vm161 = vcmp.eq.f32.partialorder %v160, 8.507059e+37
    %v162 = vand.u32 %v149, 2147483648
    %v163 = vor.u32 1.1754944e-38, %v162
    %v164 = vsel %vm161, %v163, %v159
    %v165 = vmul.f32 1.0, %v164
    %v166 = vrcp.pop %v150
    %v167 = vmul.f32 %v150, %v166
    %v168 = vsub.f32 1.0, %v167
    %v169 = vmul.f32 %v166, %v168
    %v170 = vadd.f32 %v166, %v169
    %vm171 = vweird.f32 %v150
    %vm172 = vweird.f32 %v166
    %vm173 = vmor %vm171, %vm172
    %v174 = vsel %vm173, %v166, %v170
    %v175 = vand.u32 2147483647, %v150
    %vm176 = vcmp.eq.f32.partialorder %v175, 8.507059e+37
    %v177 = vand.u32 %v150, 2147483648
    %v178 = vor.u32 1.1754944e-38, %v177
    %v179 = vsel %vm176, %v178, %v174
    %v180 = vmul.f32 1.0, %v179
    %vm181 = vcmask 523264
    %182 = vst.msk [vmem:[#allocation8] sm:$0xff] %vm181, %v165
    %183 = vst.msk [vmem:[#allocation8 + $0x8] sm:$0xff] %vm181, %v180
    // Predicated region
    $region34: #{tpu_custom_call.1} parent=1 // pred_check
      _
    $region35: #{tpu_custom_call.1} parent=1 // pred_check_branch
      %185 = sbr.rel (0) target = $region37
    $region36: #{tpu_custom_call.1} parent=1 // pred_region
      %187 = vsyncadd [#allocation4], 0
      %s188 = sshll.u32 [#allocation8], 4
      %s189 = int_to_ptr.vmem [resolvable:$true] %s188
      %s190 = sshll.u32 %s5, 4
      %s191 = int_to_ptr.hbm [resolvable:$true] %s190
      %196 = dma.vmem_to_hbm [thread:$0]  %s189, 256, %s191, [#allocation4], 128, 128, 8
    $region37: #{tpu_custom_call.1} parent=1 // pred_fallthru
      _
    // Predicated region
    $region38: #{tpu_custom_call.1} parent=1 // pred_check
      _
    $region39: #{tpu_custom_call.1} parent=1 // pred_check_branch
      %198 = sbr.rel (0) target = $region41
    $region40: #{tpu_custom_call.1} parent=1 // pred_region
      %200 = dma.done [#allocation4], 256
    $region41: #{tpu_custom_call.1} parent=1 // pred_fallthru
      _
    %201 = vsyncpa [#allocation3], 1
    %202 = vsyncpa [#allocation6], 1
    %203 = vsyncpa [#allocation4], 1

</llo_original>
